<compile_context>
chip_gen: v7x
topology: tpu7x:2x2x1
jax: 0.10.0
libtpu: 0.0.40
codegen_flags: <defaults>
</compile_context>

<pallas_src>
import functools

import jax
import jax.numpy as jnp
import numpy as np
from jax.experimental import pallas as pl
from jax.experimental.pallas import tpu as pltpu


def _round_up(x, m):
    return ((x + m - 1) // m) * m


# ----------------------------------------------------------------------------
# Pallas kernel: per-point smoothed CE in class-major layout, deferred mean.
# ----------------------------------------------------------------------------
def _smooth_ce_kernel(pred_ref, tgt_ref, out_ref, acc_ref, cnt_ref, *,
                      n_class, n_valid, tile_cols, eps):
    step = pl.program_id(0)

    @pl.when(step == 0)
    def _():
        acc_ref[...] = jnp.zeros_like(acc_ref)
        cnt_ref[...] = jnp.zeros_like(cnt_ref)

    x = pred_ref[...].astype(jnp.float32)        # (C, TN) logits, points on lanes
    t = tgt_ref[...]                             # (1, TN) int32 labels

    # Per-point (per-lane) logsumexp over the class (sublane) axis.
    m = jnp.max(x, axis=0, keepdims=True)                                 # (1, TN)
    lse = m + jnp.log(jnp.sum(jnp.exp(x - m), axis=0, keepdims=True))     # (1, TN)

    # Target logit via iota==label select (no one-hot materialization).
    cls = jax.lax.broadcasted_iota(jnp.int32, x.shape, 0)                 # (C, TN)
    pred_t = jnp.sum(jnp.where(cls == t, x, 0.0), axis=0, keepdims=True)  # (1, TN)
    col_sum = jnp.sum(x, axis=0, keepdims=True)                           # (1, TN)

    logp_t = pred_t - lse                    # log_softmax at the target class
    sum_logp = col_sum - n_class * lse       # sum_j log_softmax_j

    coef_o = eps / (n_class - 1)
    coef_t = (1.0 - eps) - coef_o
    loss = -(coef_t * logp_t + coef_o * sum_logp)                         # (1, TN)

    # Point validity: inside the un-padded range AND finite (NaN compares False).
    # Must be applied BEFORE accumulation: the OOB tail of the ragged last block
    # contains garbage that must never reach the accumulators.
    col_idx = step * tile_cols + jax.lax.broadcasted_iota(jnp.int32, loss.shape, 1)
    valid = (col_idx < n_valid) & (jnp.abs(loss) < jnp.inf)

    # Deferred reduction: elementwise VPU accumulate per step, reduce once at end.
    acc_ref[...] += jnp.where(valid, loss, 0.0)
    cnt_ref[...] += valid.astype(jnp.float32)

    @pl.when(step == pl.num_programs(0) - 1)
    def _():
        total = jnp.sum(acc_ref[...], keepdims=True)    # (1, 1)
        count = jnp.sum(cnt_ref[...], keepdims=True)    # (1, 1)
        out_ref[...] = jnp.where(count > 0.0, total / count, jnp.nan)


# ----------------------------------------------------------------------------
# Wrapper
# ----------------------------------------------------------------------------
@functools.partial(jax.jit,
                   static_argnames=("smoothing_ratio", "tile_cols", "class_major"))
def smooth_ce_loss(pred, target, smoothing_ratio=0.1, tile_cols=16384,
                   class_major=False):
    """pred: (N, C) logits (or (C, N) if class_major=True); target: (N,) labels."""
    if class_major:
        c, n = pred.shape
        pred_cm = pred                      # already lane-dense, zero extra copies
    else:
        n, c = pred.shape
        # TODO(synk): have the producer emit class-major (C, N) logits so this
        # one-time relayout pass (the only remaining extra HBM traffic) disappears.
        pred_cm = pred.T

    tgt = target.astype(jnp.int32).reshape(1, n)        # lane-dense labels (view)
    tn = min(int(tile_cols), _round_up(n, 128))          # lane-aligned point tile

    kernel = functools.partial(
        _smooth_ce_kernel,
        n_class=int(c), n_valid=int(n), tile_cols=int(tn),
        eps=float(smoothing_ratio),
    )
    out = pl.pallas_call(
        kernel,
        out_shape=jax.ShapeDtypeStruct((1, 1), jnp.float32),
        grid=(pl.cdiv(n, tn),),
        in_specs=[
            pl.BlockSpec((c, tn), lambda j: (0, j)),   # logits: points on lane axis
            pl.BlockSpec((1, tn), lambda j: (0, j)),   # labels: lane-dense row
        ],
        out_specs=pl.BlockSpec((1, 1), lambda j: (0, 0)),
        scratch_shapes=[
            pltpu.VMEM((1, tn), jnp.float32),   # per-lane masked loss accumulator
            pltpu.VMEM((1, tn), jnp.float32),   # per-lane finite/valid counter
        ],
        compiler_params=pltpu.CompilerParams(
            # Single reduction axis -> "arbitrary".
            # TODO(synk): on v7x add a leading size-2 "parallel" axis (one per
            # TensorCore) with per-core partial sums; no effect on v5e/v6e.
            dimension_semantics=("arbitrary",),
        ),
    )(pred_cm, tgt)
    return out[0, 0]


class SmoothCELoss:
    """Mirror of the PyTorch module's forward."""

    def __init__(self, smoothing_ratio=0.1):
        self.smoothing_ratio = float(smoothing_ratio)

    def __call__(self, pred, target):
        return smooth_ce_loss(pred, target, smoothing_ratio=self.smoothing_ratio)


# ----------------------------------------------------------------------------
# Pure-numpy reference (mirrors the PyTorch forward exactly).
# ----------------------------------------------------------------------------
def reference_loss(pred, target, eps):
    pred = np.asarray(pred, dtype=np.float64)
    target = np.asarray(target)
    n, c = pred.shape
    one_hot = np.zeros_like(pred)
    one_hot[np.arange(n), target] = 1.0
    one_hot = one_hot * (1.0 - eps) + (1.0 - one_hot) * eps / (c - 1)
    m = pred.max(axis=1, keepdims=True)
    log_prb = pred - (m + np.log(np.exp(pred - m).sum(axis=1, keepdims=True)))
    loss = -(one_hot * log_prb).sum(axis=1)
    loss = loss[np.isfinite(loss)]
    return loss.mean()


if __name__ == "__main__":
    key = jax.random.PRNGKey(0)
    N, C = 300, 13                       # ragged point count (not a 128 multiple)
    k1, k2 = jax.random.split(key)
    pred = jax.random.normal(k1, (N, C), dtype=jnp.float32) * 3.0
    target = jax.random.randint(k2, (N,), 0, C, dtype=jnp.int32)

    criterion = SmoothCELoss(smoothing_ratio=0.1)
    loss = jax.block_until_ready(criterion(pred, target))

    ref = reference_loss(np.asarray(pred), np.asarray(target), 0.1)
    np.testing.assert_allclose(float(loss), float(ref), rtol=1e-5, atol=1e-5)

    # Class-major path (producer already emits (C, N) logits): zero extra copies.
    loss_cm = jax.block_until_ready(
        smooth_ce_loss(pred.T, target, smoothing_ratio=0.1, class_major=True))
    np.testing.assert_allclose(float(loss_cm), float(ref), rtol=1e-5, atol=1e-5)

    print("KERNEL_OK")
</pallas_src>

<mosaic_0001>
module attributes {stable_mosaic.version = 11 : i64} {
  func.func @_smooth_ce_kernel(%arg0: i32, %arg1: memref<13x384xf32, #tpu.memory_space<vmem>>, %arg2: memref<1x384xi32, #tpu.memory_space<vmem>>, %arg3: memref<1x1xf32, #tpu.memory_space<vmem>>, %arg4: memref<1x384xf32, #tpu.memory_space<vmem>>, %arg5: memref<1x384xf32, #tpu.memory_space<vmem>>) attributes {dimension_semantics = [#tpu.dimension_semantics<arbitrary>], iteration_bounds = array<i64: 1>, scalar_prefetch = 0 : i64, scratch_operands = 2 : i64, tpu.core_type = #tpu.core_type<tc>, window_params = [{transform_indices = @transform_0, window_bounds = array<i64: 13, 384>}, {transform_indices = @transform_1, window_bounds = array<i64: 1, 384>}, {pipeline_mode = #tpu.pipeline_mode<synchronous>, transform_indices = @transform_2, window_bounds = array<i64: 1, 1>}]} {
    %c0_i32 = arith.constant 0 : i32
    %0 = arith.cmpi eq, %arg0, %c0_i32 : i32
    %1 = arith.extui %0 : i1 to i32
    %c0_i32_0 = arith.constant 0 : i32
    %2 = arith.cmpi ne, %1, %c0_i32_0 : i32
    scf.if %2 {
      %cst_24 = arith.constant 0.000000e+00 : f32
      %57 = vector.broadcast %cst_24 : f32 to vector<1x384xf32>
      %c0_25 = arith.constant 0 : index
      %c0_26 = arith.constant 0 : index
      %58 = vector.load %arg4[%c0_25, %c0_26] : memref<1x384xf32, #tpu.memory_space<vmem>>, vector<1x384xf32>
      tpu.vector_store %arg4[%c0_25, %c0_26], %57 {strides = array<i32>} : memref<1x384xf32, #tpu.memory_space<vmem>>, vector<1x384xf32>,
      %cst_27 = arith.constant 0.000000e+00 : f32
      %59 = vector.broadcast %cst_27 : f32 to vector<1x384xf32>
      %c0_28 = arith.constant 0 : index
      %c0_29 = arith.constant 0 : index
      %60 = vector.load %arg5[%c0_28, %c0_29] : memref<1x384xf32, #tpu.memory_space<vmem>>, vector<1x384xf32>
      tpu.vector_store %arg5[%c0_28, %c0_29], %59 {strides = array<i32>} : memref<1x384xf32, #tpu.memory_space<vmem>>, vector<1x384xf32>,
    } else {
    }
    %c0 = arith.constant 0 : index
    %c0_1 = arith.constant 0 : index
    %3 = vector.load %arg1[%c0, %c0_1] : memref<13x384xf32, #tpu.memory_space<vmem>>, vector<13x384xf32>
    %c0_2 = arith.constant 0 : index
    %c0_3 = arith.constant 0 : index
    %4 = vector.load %arg2[%c0_2, %c0_3] : memref<1x384xi32, #tpu.memory_space<vmem>>, vector<1x384xi32>
    %cst = arith.constant dense<0xFF800000> : vector<384xf32>
    %5 = vector.multi_reduction <maximumf>, %3, %cst [0] : vector<13x384xf32> to vector<384xf32>
    %6 = vector.shape_cast %5 : vector<384xf32> to vector<1x384xf32>
    %7 = vector.broadcast %6 : vector<1x384xf32> to vector<13x384xf32>
    %8 = arith.subf %3, %7 : vector<13x384xf32>
    %9 = math.exp %8 : vector<13x384xf32>
    %cst_4 = arith.constant dense<0.000000e+00> : vector<384xf32>
    %10 = vector.multi_reduction <add>, %9, %cst_4 [0] : vector<13x384xf32> to vector<384xf32>
    %11 = vector.shape_cast %10 : vector<384xf32> to vector<1x384xf32>
    %12 = math.log %11 : vector<1x384xf32>
    %13 = arith.addf %6, %12 : vector<1x384xf32>
    %14 = tpu.iota {dimensions = array<i32: 0>} : vector<13x384xi32>
    %15 = vector.broadcast %4 : vector<1x384xi32> to vector<13x384xi32>
    %16 = arith.cmpi eq, %14, %15 : vector<13x384xi32>
    %cst_5 = arith.constant 0.000000e+00 : f32
    %17 = vector.broadcast %cst_5 : f32 to vector<13x384xf32>
    %18 = arith.select %16, %3, %17 : vector<13x384xi1>, vector<13x384xf32>
    %cst_6 = arith.constant dense<0.000000e+00> : vector<384xf32>
    %19 = vector.multi_reduction <add>, %18, %cst_6 [0] : vector<13x384xf32> to vector<384xf32>
    %20 = vector.shape_cast %19 : vector<384xf32> to vector<1x384xf32>
    %cst_7 = arith.constant dense<0.000000e+00> : vector<384xf32>
    %21 = vector.multi_reduction <add>, %3, %cst_7 [0] : vector<13x384xf32> to vector<384xf32>
    %22 = vector.shape_cast %21 : vector<384xf32> to vector<1x384xf32>
    %23 = arith.subf %20, %13 : vector<1x384xf32>
    %cst_8 = arith.constant 1.300000e+01 : f32
    %24 = vector.broadcast %cst_8 : f32 to vector<1x384xf32>
    %25 = arith.mulf %24, %13 : vector<1x384xf32>
    %26 = arith.subf %22, %25 : vector<1x384xf32>
    %cst_9 = arith.constant 0.891666651 : f32
    %27 = vector.broadcast %cst_9 : f32 to vector<1x384xf32>
    %28 = arith.mulf %27, %23 : vector<1x384xf32>
    %cst_10 = arith.constant 0.00833333377 : f32
    %29 = vector.broadcast %cst_10 : f32 to vector<1x384xf32>
    %30 = arith.mulf %29, %26 : vector<1x384xf32>
    %31 = arith.addf %28, %30 : vector<1x384xf32>
    %cst_11 = arith.constant 0.000000e+00 : f32
    %32 = vector.broadcast %cst_11 : f32 to vector<1x384xf32>
    %33 = arith.subf %32, %31 : vector<1x384xf32>
    %c384_i32 = arith.constant 384 : i32
    %34 = arith.muli %arg0, %c384_i32 : i32
    %35 = tpu.iota {dimensions = array<i32: 1>} : vector<1x384xi32>
    %36 = vector.broadcast %34 : i32 to vector<1x384xi32>
    %37 = arith.addi %36, %35 : vector<1x384xi32>
    %c300_i32 = arith.constant 300 : i32
    %38 = vector.broadcast %c300_i32 : i32 to vector<1x384xi32>
    %39 = arith.cmpi slt, %37, %38 : vector<1x384xi32>
    %40 = math.absf %33 : vector<1x384xf32>
    %cst_12 = arith.constant 0x7F800000 : f32
    %41 = vector.broadcast %cst_12 : f32 to vector<1x384xf32>
    %42 = arith.cmpf olt, %40, %41 : vector<1x384xf32>
    %43 = arith.andi %39, %42 : vector<1x384xi1>
    %c0_13 = arith.constant 0 : index
    %c0_14 = arith.constant 0 : index
    %44 = vector.load %arg4[%c0_13, %c0_14] : memref<1x384xf32, #tpu.memory_space<vmem>>, vector<1x384xf32>
    %cst_15 = arith.constant 0.000000e+00 : f32
    %45 = vector.broadcast %cst_15 : f32 to vector<1x384xf32>
    %46 = arith.select %43, %33, %45 : vector<1x384xi1>, vector<1x384xf32>
    %47 = arith.addf %44, %46 : vector<1x384xf32>
    %c0_16 = arith.constant 0 : index
    %c0_17 = arith.constant 0 : index
    %48 = vector.load %arg4[%c0_16, %c0_17] : memref<1x384xf32, #tpu.memory_space<vmem>>, vector<1x384xf32>
    tpu.vector_store %arg4[%c0_16, %c0_17], %47 {strides = array<i32>} : memref<1x384xf32, #tpu.memory_space<vmem>>, vector<1x384xf32>,
    %c0_18 = arith.constant 0 : index
    %c0_19 = arith.constant 0 : index
    %49 = vector.load %arg5[%c0_18, %c0_19] : memref<1x384xf32, #tpu.memory_space<vmem>>, vector<1x384xf32>
    %50 = arith.extui %43 : vector<1x384xi1> to vector<1x384xi32>
    %51 = arith.sitofp %50 : vector<1x384xi32> to vector<1x384xf32>
    %52 = arith.addf %49, %51 : vector<1x384xf32>
    %c0_20 = arith.constant 0 : index
    %c0_21 = arith.constant 0 : index
    %53 = vector.load %arg5[%c0_20, %c0_21] : memref<1x384xf32, #tpu.memory_space<vmem>>, vector<1x384xf32>
    tpu.vector_store %arg5[%c0_20, %c0_21], %52 {strides = array<i32>} : memref<1x384xf32, #tpu.memory_space<vmem>>, vector<1x384xf32>,
    %c0_i32_22 = arith.constant 0 : i32
    %54 = arith.cmpi eq, %arg0, %c0_i32_22 : i32
    %55 = arith.extui %54 : i1 to i32
    %c0_i32_23 = arith.constant 0 : i32
    %56 = arith.cmpi ne, %55, %c0_i32_23 : i32
    scf.if %56 {
      %c0_24 = arith.constant 0 : index
      %c0_25 = arith.constant 0 : index
      %57 = vector.load %arg4[%c0_24, %c0_25] : memref<1x384xf32, #tpu.memory_space<vmem>>, vector<1x384xf32>
      %58 = vector.shape_cast %57 : vector<1x384xf32> to vector<1x1x384xf32>
      %cst_26 = arith.constant dense<0.000000e+00> : vector<1xf32>
      %59 = vector.multi_reduction <add>, %58, %cst_26 [1, 2] : vector<1x1x384xf32> to vector<1xf32>
      %60 = vector.shape_cast %59 : vector<1xf32> to vector<1x1x1xf32>
      %61 = vector.extract %60[0, 0, 0] : f32 from vector<1x1x1xf32>
      %62 = vector.broadcast %61 : f32 to vector<1x1xf32>
      %c0_27 = arith.constant 0 : index
      %c0_28 = arith.constant 0 : index
      %63 = vector.load %arg5[%c0_27, %c0_28] : memref<1x384xf32, #tpu.memory_space<vmem>>, vector<1x384xf32>
      %64 = vector.shape_cast %63 : vector<1x384xf32> to vector<1x1x384xf32>
      %cst_29 = arith.constant dense<0.000000e+00> : vector<1xf32>
      %65 = vector.multi_reduction <add>, %64, %cst_29 [1, 2] : vector<1x1x384xf32> to vector<1xf32>
      %66 = vector.shape_cast %65 : vector<1xf32> to vector<1x1x1xf32>
      %67 = vector.extract %66[0, 0, 0] : f32 from vector<1x1x1xf32>
      %68 = vector.broadcast %67 : f32 to vector<1x1xf32>
      %cst_30 = arith.constant 0.000000e+00 : f32
      %69 = vector.broadcast %cst_30 : f32 to vector<1x1xf32>
      %70 = arith.cmpf ogt, %68, %69 : vector<1x1xf32>
      %71 = arith.divf %62, %68 : vector<1x1xf32>
      %cst_31 = arith.constant 0x7FC00000 : f32
      %72 = vector.broadcast %cst_31 : f32 to vector<1x1xf32>
      %73 = arith.select %70, %71, %72 : vector<1x1xi1>, vector<1x1xf32>
      %c0_32 = arith.constant 0 : index
      %c0_33 = arith.constant 0 : index
      %74 = vector.load %arg3[%c0_32, %c0_33] : memref<1x1xf32, #tpu.memory_space<vmem>>, vector<1x1xf32>
      tpu.vector_store %arg3[%c0_32, %c0_33], %73 {strides = array<i32>} : memref<1x1xf32, #tpu.memory_space<vmem>>, vector<1x1xf32>,
    } else {
    }
    return
  }
  func.func @transform_0(%arg0: i32) -> (i32, i32) {
    %c0_i32 = arith.constant 0 : i32
    %c0_i32_0 = arith.constant 0 : i32
    return %c0_i32, %arg0 : i32, i32
  }
  func.func @transform_1(%arg0: i32) -> (i32, i32) {
    %c0_i32 = arith.constant 0 : i32
    %c0_i32_0 = arith.constant 0 : i32
    return %c0_i32, %arg0 : i32, i32
  }
  func.func @transform_2(%arg0: i32) -> (i32, i32) {
    %c0_i32 = arith.constant 0 : i32
    %c0_i32_0 = arith.constant 0 : i32
    %c0_i32_1 = arith.constant 0 : i32
    return %c0_i32, %c0_i32_0 : i32, i32
  }
}

</mosaic_0001>

<llo_original>
// kernel: smooth_ce_loss.1
$region0: #{smooth_ce_loss.1}
  #allocation0 [shape = 'u32[]', space=smem, size = 0x4, offset = 0x4, fixed_abs, tag = 'smem constant byte address 0x4 - core index']
  #allocation1 [shape = 'u32[144,128]{1,0:T(1,128)}', space=vmem, size = 0x12000, scoped, tag = 'internal scratch']
  #allocation2 [shape = 'f32[1,384]{1,0:T(1,128)}', space=vmem, size = 0x600, scoped, tag = 'scratch operand']
  #allocation3 [shape = 'f32[1,384]{1,0:T(1,128)}', space=vmem, size = 0x600, scoped, tag = 'scratch operand']
  %s0 = inlined_call_operand.hbm [shape: f32[13,300], index: 0, kind: input, shape index: {}]
  %s1 = inlined_call_operand.vmem [shape: s32[1,300], index: 1, kind: input, shape index: {}]
  %s2 = inlined_call_operand.hbm [shape: f32[1,1], index: 2, kind: output, shape index: {}]
  %s3 = sld [smem:[#allocation0]]
  $region30: #{smooth_ce_loss.1} parent=0
    _
  %s5 = ssub.s32 1, %s3
  %s6 = scalar_select 0, %s5, %s3
  $region1: #{smooth_ce_loss.1} parent=0
    #allocation4 [shape = 'u8[24576]{0}', space=vmem, size = 0x6000, scoped, tag = 'input window, operand 0, single buffered']
    #allocation5 [shape = 's32[1]{0}', space=sflag, size = 0x4, scoped, tag = 'scoped memory for smooth_ce_loss.1']
    #allocation6 [shape = 's32[1]{0}', space=sflag, size = 0x4, scoped, tag = 'scoped memory for smooth_ce_loss.1']
    #allocation7 [shape = 'u8[512]{0}', space=vmem, size = 0x400, scoped, tag = 'output window, operand 0, single buffered']
    %7 = vsyncpa [#allocation5], 0
    %8 = vsyncpa [#allocation6], 0
    // Predicated region
    $region2: #{smooth_ce_loss.1} parent=1 // pred_check
      _
    $region3: #{smooth_ce_loss.1} parent=1 // pred_check_branch
      %10 = sbr.rel (0) target = $region5
    $region4: #{smooth_ce_loss.1} parent=1 // pred_region
      %s12 = ssub.s32 768, 768
      %13 = vsyncadd [#allocation5], %s12
      %s14 = sshll.u32 [#allocation4], 4
      %s15 = int_to_ptr.vmem [resolvable:$true] %s14
      %20 = dma.hbm_to_vmem [thread:$0]  %s0, 768, %s15, [#allocation5], 384, 384, 24
    $region5: #{smooth_ce_loss.1} parent=1 // pred_fallthru
      _
    // Predicated region
    $region6: #{smooth_ce_loss.1} parent=1 // pred_check
      _
    $region7: #{smooth_ce_loss.1} parent=1 // pred_check_branch
      %22 = sbr.rel (0) target = $region9
    $region8: #{smooth_ce_loss.1} parent=1 // pred_region
      _
    $region9: #{smooth_ce_loss.1} parent=1 // pred_fallthru
      _
    // Predicated region
    $region10: #{smooth_ce_loss.1} parent=1 // pred_check
      _
    $region11: #{smooth_ce_loss.1} parent=1 // pred_check_branch
      %24 = sbr.rel (0) target = $region13
    $region12: #{smooth_ce_loss.1} parent=1 // pred_region
      %25 = dma.done [#allocation5], 768
    $region13: #{smooth_ce_loss.1} parent=1 // pred_fallthru
      _
    %p26 = scmp.eq.s32.totalorder 0, 0
    // Predicated region
    $region14: #{smooth_ce_loss.1} parent=1 // pred_check
      %p27 = pneg %p26
    $region15: #{smooth_ce_loss.1} parent=1 // pred_check_branch
      %29 = sbr.rel (%p27) target = $region17
    $region16: #{smooth_ce_loss.1} parent=1 // pred_region
      %v30 = vlaneseq
      %vm31 = vcmp.ge.s32.totalorder %v30, 0
      %vm32 = vcmp.lt.s32.totalorder %v30, 384
      %vm33 = vmand %vm31, %vm32
      %34 = vst.msk [vmem:[#allocation2] sm:$0x7] %vm33, 0.0
      %35 = vst.msk [vmem:[#allocation3] sm:$0x7] %vm33, 0.0
    $region17: #{smooth_ce_loss.1} parent=1 // pred_fallthru
      _
    %v36 = vld [vmem:[#allocation4] sm:$0xff]
    %v37 = vld [vmem:[#allocation4 + $0x8] sm:$0xff]
    %v38 = vld [vmem:[#allocation4 + $0x10] sm:$0xff]
    %v39 = vld [vmem:[#allocation4 + $0x18] sm:$0x1f]
    %v40 = vld [vmem:[#allocation4 + $0x20] sm:$0x1f]
    %v41 = vld [vmem:[#allocation4 + $0x28] sm:$0x1f]
    %v42 = vld [vmem:[%s1] sm:$0x7]
    %vm43 = vcmask 1044480
    %v44 = vsel %vm43, %v39, -inf
    %v45 = vmax.f32 %v36, %v44
    %v46 = vrot.slane %v45, 4
    %v47 = vmax.f32 %v45, %v46
    %v48 = vrot.slane %v47, 2
    %v49 = vmax.f32 %v47, %v48
    %v50 = vrot.slane %v49, 1
    %v51 = vmax.f32 %v49, %v50
    %v52 = vsel %vm43, %v40, -inf
    %v53 = vmax.f32 %v37, %v52
    %v54 = vrot.slane %v53, 4
    %v55 = vmax.f32 %v53, %v54
    %v56 = vrot.slane %v55, 2
    %v57 = vmax.f32 %v55, %v56
    %v58 = vrot.slane %v57, 1
    %v59 = vmax.f32 %v57, %v58
    %v60 = vsel %vm43, %v41, -inf
    %v61 = vmax.f32 %v38, %v60
    %v62 = vrot.slane %v61, 4
    %v63 = vmax.f32 %v61, %v62
    %v64 = vrot.slane %v63, 2
    %v65 = vmax.f32 %v63, %v64
    %v66 = vrot.slane %v65, 1
    %v67 = vmax.f32 %v65, %v66
    %v68 = vsub.f32 %v36, %v51
    %v69 = vsub.f32 %v37, %v59
    %v70 = vsub.f32 %v38, %v67
    %v71 = vsub.f32 %v39, %v51
    %v72 = vsub.f32 %v40, %v59
    %v73 = vsub.f32 %v41, %v67
    %v74 = vmul.f32 %v68, 1.442695
    %v75 = vpow.pop %v74
    %v76 = vmul.f32 %v69, 1.442695
    %v77 = vpow.pop %v76
    %v78 = vmul.f32 %v70, 1.442695
    %v79 = vpow.pop %v78
    %v80 = vmul.f32 %v71, 1.442695
    %v81 = vpow.pop %v80
    %v82 = vmul.f32 %v72, 1.442695
    %v83 = vpow.pop %v82
    %v84 = vmul.f32 %v73, 1.442695
    %v85 = vpow.pop %v84
    %v86 = vsel %vm43, %v81, 0.0
    %v87 = vadd.f32 %v75, %v86
    %v88 = vrot.slane %v87, 4
    %v89 = vadd.f32 %v87, %v88
    %v90 = vrot.slane %v89, 2
    %v91 = vadd.f32 %v89, %v90
    %v92 = vrot.slane %v91, 1
    %v93 = vadd.f32 %v91, %v92
    %v94 = vsel %vm43, %v83, 0.0
    %v95 = vadd.f32 %v77, %v94
    %v96 = vrot.slane %v95, 4
    %v97 = vadd.f32 %v95, %v96
    %v98 = vrot.slane %v97, 2
    %v99 = vadd.f32 %v97, %v98
    %v100 = vrot.slane %v99, 1
    %v101 = vadd.f32 %v99, %v100
    %v102 = vsel %vm43, %v85, 0.0
    %v103 = vadd.f32 %v79, %v102
    %v104 = vrot.slane %v103, 4
    %v105 = vadd.f32 %v103, %v104
    %v106 = vrot.slane %v105, 2
    %v107 = vadd.f32 %v105, %v106
    %v108 = vrot.slane %v107, 1
    %v109 = vadd.f32 %v107, %v108
    %v110 = vlog2.pop %v93
    %v111 = vmul.f32 %v110, 0.6931472
    %v112 = vlog2.pop %v101
    %v113 = vmul.f32 %v112, 0.6931472
    %v114 = vlog2.pop %v109
    %v115 = vmul.f32 %v114, 0.6931472
    %v116 = vadd.f32 %v51, %v111
    %v117 = vadd.f32 %v59, %v113
    %v118 = vadd.f32 %v67, %v115
    %v119 = vlaneseq
    %v120 = vshrl.u32 %v119, 7
    %v121 = vadd.s32 %v120, 8
    %v122 = vlaneseq
    %v123 = vshrl.u32 %v122, 7
    %v124 = vsub.s32 0, %v123
    %v125 = vrot.slane %v42, %v124
    %v126 = vlaneseq
    %v127 = vshrl.u32 %v126, 7
    %v128 = vsub.s32 1, %v127
    %v129 = vrot.slane %v42, %v128
    %v130 = vlaneseq
    %v131 = vshrl.u32 %v130, 7
    %v132 = vsub.s32 2, %v131
    %v133 = vrot.slane %v42, %v132
    %vm134 = vcmp.eq.s32.totalorder %v120, %v125
    %vm135 = vcmp.eq.s32.totalorder %v120, %v129
    %vm136 = vcmp.eq.s32.totalorder %v120, %v133
    %vm137 = vcmp.eq.s32.totalorder %v121, %v125
    %vm138 = vcmp.eq.s32.totalorder %v121, %v129
    %vm139 = vcmp.eq.s32.totalorder %v121, %v133
    %v140 = vsel %vm134, %v36, 0.0
    %v141 = vsel %vm135, %v37, 0.0
    %v142 = vsel %vm136, %v38, 0.0
    %v143 = vsel %vm137, %v39, 0.0
    %v144 = vsel %vm138, %v40, 0.0
    %v145 = vsel %vm139, %v41, 0.0
    %v146 = vsel %vm43, %v143, 0.0
    %v147 = vadd.f32 %v140, %v146
    %v148 = vrot.slane %v147, 4
    %v149 = vadd.f32 %v147, %v148
    %v150 = vrot.slane %v149, 2
    %v151 = vadd.f32 %v149, %v150
    %v152 = vrot.slane %v151, 1
    %v153 = vadd.f32 %v151, %v152
    %v154 = vsel %vm43, %v144, 0.0
    %v155 = vadd.f32 %v141, %v154
    %v156 = vrot.slane %v155, 4
    %v157 = vadd.f32 %v155, %v156
    %v158 = vrot.slane %v157, 2
    %v159 = vadd.f32 %v157, %v158
    %v160 = vrot.slane %v159, 1
    %v161 = vadd.f32 %v159, %v160
    %v162 = vsel %vm43, %v145, 0.0
    %v163 = vadd.f32 %v142, %v162
    %v164 = vrot.slane %v163, 4
    %v165 = vadd.f32 %v163, %v164
    %v166 = vrot.slane %v165, 2
    %v167 = vadd.f32 %v165, %v166
    %v168 = vrot.slane %v167, 1
    %v169 = vadd.f32 %v167, %v168
    %v170 = vsel %vm43, %v39, 0.0
    %v171 = vadd.f32 %v36, %v170
    %v172 = vrot.slane %v171, 4
    %v173 = vadd.f32 %v171, %v172
    %v174 = vrot.slane %v173, 2
    %v175 = vadd.f32 %v173, %v174
    %v176 = vrot.slane %v175, 1
    %v177 = vadd.f32 %v175, %v176
    %v178 = vsel %vm43, %v40, 0.0
    %v179 = vadd.f32 %v37, %v178
    %v180 = vrot.slane %v179, 4
    %v181 = vadd.f32 %v179, %v180
    %v182 = vrot.slane %v181, 2
    %v183 = vadd.f32 %v181, %v182
    %v184 = vrot.slane %v183, 1
    %v185 = vadd.f32 %v183, %v184
    %v186 = vsel %vm43, %v41, 0.0
    %v187 = vadd.f32 %v38, %v186
    %v188 = vrot.slane %v187, 4
    %v189 = vadd.f32 %v187, %v188
    %v190 = vrot.slane %v189, 2
    %v191 = vadd.f32 %v189, %v190
    %v192 = vrot.slane %v191, 1
    %v193 = vadd.f32 %v191, %v192
    %v194 = vsub.f32 %v153, %v116
    %v195 = vsub.f32 %v161, %v117
    %v196 = vsub.f32 %v169, %v118
    %v197 = vmul.f32 %v116, 13.0
    %v198 = vmul.f32 %v117, 13.0
    %v199 = vmul.f32 %v118, 13.0
    %v200 = vsub.f32 %v177, %v197
    %v201 = vsub.f32 %v185, %v198
    %v202 = vsub.f32 %v193, %v199
    %v203 = vmul.f32 %v194, 0.89166665
    %v204 = vmul.f32 %v195, 0.89166665
    %v205 = vmul.f32 %v196, 0.89166665
    %v206 = vmul.f32 %v200, 0.008333334
    %v207 = vmul.f32 %v201, 0.008333334
    %v208 = vmul.f32 %v202, 0.008333334
    %v209 = vadd.f32 %v203, %v206
    %v210 = vadd.f32 %v204, %v207
    %v211 = vadd.f32 %v205, %v208
    %v212 = vsub.f32 0.0, %v209
    %v213 = vsub.f32 0.0, %v210
    %v214 = vsub.f32 0.0, %v211
    %s215 = smul.u32 0, 384
    %v216 = vlaneseq
    %v217 = vand.u32 %v216, 127
    %v218 = vadd.s32 %v217, 128
    %v219 = vadd.s32 %v217, 256
    %v220 = vstv %s215
    %v221 = vadd.s32 %v220, %v217
    %v222 = vadd.s32 %v220, %v218
    %v223 = vadd.s32 %v220, %v219
    %vm224 = vcmp.lt.s32.totalorder %v221, 300
    %vm225 = vcmp.lt.s32.totalorder %v222, 300
    %vm226 = vcmp.lt.s32.totalorder %v223, 300
    %v227 = vand.u32 2147483647, %v212
    %v228 = vand.u32 2147483647, %v213
    %v229 = vand.u32 2147483647, %v214
    %vm230 = vcmp.lt.f32.partialorder %v227, inf
    %vm231 = vcmp.lt.f32.partialorder %v228, inf
    %vm232 = vcmp.lt.f32.partialorder %v229, inf
    %vm233 = vmand %vm224, %vm230
    %vm234 = vmand %vm225, %vm231
    %vm235 = vmand %vm226, %vm232
    %v236 = vld [vmem:[#allocation2] sm:$0x7]
    %v237 = vsel %vm233, %v212, 0.0
    %v238 = vsel %vm234, %v213, 0.0
    %v239 = vsel %vm235, %v214, 0.0
    %v243 = vcombine.low %v237, %v238
    %v245 = vunpack.c.l.s4 1966171168
    %v246 = vunpack.c.0.s8 %v245
    %v247 = vlaneseq
    %v248 = vshrl.u32 %v247, 7
    %v249 = vsub.s32 %v246, %v248
    %v250 = vrot.slane %v243, %v249
    %v252 = vunpack.c.l.s4 1966171168
    %v253 = vunpack.c.0.s8 %v252
    %v254 = vlaneseq
    %v255 = vshrl.u32 %v254, 7
    %v256 = vsub.s32 %v253, %v255
    %v257 = vrot.slane %v239, %v256
    %v258 = vcombine.low %v250, %v257
    %v260 = vunpack.c.l.s4 1966171168
    %v261 = vunpack.c.0.s8 %v260
    %v262 = vlaneseq
    %v263 = vshrl.u32 %v262, 7
    %v264 = vsub.s32 %v261, %v263
    %v265 = vrot.slane %v258, %v264
    %v267 = vadd.f32 %v236, %v265
    %v268 = vlaneseq
    %vm269 = vcmp.ge.s32.totalorder %v268, 0
    %vm270 = vcmp.lt.s32.totalorder %v268, 384
    %vm271 = vmand %vm269, %vm270
    %272 = vst.msk [vmem:[#allocation2] sm:$0x7] %vm271, %v267
    %v273 = vld [vmem:[#allocation3] sm:$0x7]
    %v274 = vsel %vm233, 1, 0
    %v275 = vsel %vm234, 1, 0
    %v276 = vsel %vm235, 1, 0
    %v277 = vcvt.s32.f32 %v274
    %v278 = vcvt.s32.f32 %v275
    %v279 = vcvt.s32.f32 %v276
    %v283 = vcombine.low %v277, %v278
    %v285 = vunpack.c.l.s4 1966171168
    %v286 = vunpack.c.0.s8 %v285
    %v287 = vlaneseq
    %v288 = vshrl.u32 %v287, 7
    %v289 = vsub.s32 %v286, %v288
    %v290 = vrot.slane %v283, %v289
    %v292 = vunpack.c.l.s4 1966171168
    %v293 = vunpack.c.0.s8 %v292
    %v294 = vlaneseq
    %v295 = vshrl.u32 %v294, 7
    %v296 = vsub.s32 %v293, %v295
    %v297 = vrot.slane %v279, %v296
    %v298 = vcombine.low %v290, %v297
    %v300 = vunpack.c.l.s4 1966171168
    %v301 = vunpack.c.0.s8 %v300
    %v302 = vlaneseq
    %v303 = vshrl.u32 %v302, 7
    %v304 = vsub.s32 %v301, %v303
    %v305 = vrot.slane %v298, %v304
    %v307 = vadd.f32 %v273, %v305
    %308 = vst.msk [vmem:[#allocation3] sm:$0x7] %vm271, %v307
    // Predicated region
    $region18: #{smooth_ce_loss.1} parent=1 // pred_check
      %p309 = pneg %p26
    $region19: #{smooth_ce_loss.1} parent=1 // pred_check_branch
      %311 = sbr.rel (%p309) target = $region21
    $region20: #{smooth_ce_loss.1} parent=1 // pred_region
      %v312 = vld [vmem:[#allocation2] sm:$0x7]
      %v314 = vlaneseq
      %v315 = vshrl.u32 %v314, 7
      %v316 = vsub.s32 0, %v315
      %v317 = vrot.slane %v312, %v316
      %v318 = vlaneseq
      %v319 = vshrl.u32 %v318, 7
      %v320 = vsub.s32 1, %v319
      %v321 = vrot.slane %v312, %v320
      %v322 = vlaneseq
      %v323 = vshrl.u32 %v322, 7
      %v324 = vsub.s32 2, %v323
      %v325 = vrot.slane %v312, %v324
      %vm329 = vcmask 1040384
      %v330 = vsel %vm329, %v317, 0.0
      %v331 = vsel %vm329, %v321, 0.0
      %v332 = vadd.f32 %v330, %v331
      %v333 = vsel %vm329, %v325, 0.0
      %v334 = vadd.f32 %v332, %v333
      %335 = vadd.xlane.f32.xlu0 %v334
      %v336 = vpop.xlane.xlu0 %335
      %v337 = vrot.slane %v336, 4
      %v338 = vadd.f32 %v336, %v337
      %v339 = vrot.slane %v338, 2
      %v340 = vadd.f32 %v338, %v339
      %v341 = vrot.slane %v340, 1
      %v342 = vadd.f32 %v340, %v341
      %s343 = vtos %v342
      %v344 = vstv %s343
      %v345 = vld [vmem:[#allocation3] sm:$0x7]
      %v347 = vlaneseq
      %v348 = vshrl.u32 %v347, 7
      %v349 = vsub.s32 0, %v348
      %v350 = vrot.slane %v345, %v349
      %v351 = vlaneseq
      %v352 = vshrl.u32 %v351, 7
      %v353 = vsub.s32 1, %v352
      %v354 = vrot.slane %v345, %v353
      %v355 = vlaneseq
      %v356 = vshrl.u32 %v355, 7
      %v357 = vsub.s32 2, %v356
      %v358 = vrot.slane %v345, %v357
      %v362 = vsel %vm329, %v350, 0.0
      %v363 = vsel %vm329, %v354, 0.0
      %v364 = vadd.f32 %v362, %v363
      %v365 = vsel %vm329, %v358, 0.0
      %v366 = vadd.f32 %v364, %v365
      %367 = vadd.xlane.f32.xlu0 %v366
      %v368 = vpop.xlane.xlu0 %367
      %v369 = vrot.slane %v368, 4
      %v370 = vadd.f32 %v368, %v369
      %v371 = vrot.slane %v370, 2
      %v372 = vadd.f32 %v370, %v371
      %v373 = vrot.slane %v372, 1
      %v374 = vadd.f32 %v372, %v373
      %s375 = vtos %v374
      %v376 = vstv %s375
      %vm377 = vcmp.gt.f32.partialorder %v376, 0.0
      %v378 = vrcp.pop %v376
      %v379 = vmul.f32 %v344, %v378
      %v380 = vsel %vm377, %v379, nan
      %vm381 = vcmask 0
      %382 = vst.msk [vmem:[#allocation7] sm:$0x1] %vm381, %v380
    $region21: #{smooth_ce_loss.1} parent=1 // pred_fallthru
      _
    // Predicated region
    $region22: #{smooth_ce_loss.1} parent=1 // pred_check
      _
    $region23: #{smooth_ce_loss.1} parent=1 // pred_check_branch
      %384 = sbr.rel (0) target = $region25
    $region24: #{smooth_ce_loss.1} parent=1 // pred_region
      %s386 = ssub.s32 16, 16
      %387 = vsyncadd [#allocation6], %s386
      %s389 = sshll.u32 [#allocation7], 4
      %s390 = int_to_ptr.vmem [resolvable:$true] %s389
      %392 = dma.vmem_to_hbm [thread:$0]  %s390, 16, %s2, [#allocation6]
    $region25: #{smooth_ce_loss.1} parent=1 // pred_fallthru
      _
    // Predicated region
    $region26: #{smooth_ce_loss.1} parent=1 // pred_check
      _
    $region27: #{smooth_ce_loss.1} parent=1 // pred_check_branch
      %394 = sbr.rel (0) target = $region29
    $region28: #{smooth_ce_loss.1} parent=1 // pred_region
      %395 = dma.done [#allocation6], 16
    $region29: #{smooth_ce_loss.1} parent=1 // pred_fallthru
      _
    %396 = vsyncpa [#allocation5], 1
    %397 = vsyncpa [#allocation6], 1

</llo_original>
